<compile_context>
chip_gen: v7x
topology: tpu7x:2x2x1
jax: 0.10.0
libtpu: 0.0.40
codegen_flags: <defaults>
</compile_context>

<pallas_src>
import math
from functools import partial

import jax
import jax.numpy as jnp
from jax.experimental import pallas as pl
from jax.experimental.pallas import tpu as pltpu


# ----------------------------- config (cfg.*) ------------------------------
ACTION_SCALE = 1.0
USE_ACTION_OUT_TANH = True
USE_LOG_STD_CLIP = True
LOG_STD_CLIP_MIN = -20.0
LOG_STD_CLIP_MAX = 2.0
USE_ACTION_CLIP = True
ACTION_CLIP = 1.0

_LOG_SQRT_2PI = 0.5 * math.log(2.0 * math.pi)

DEFAULT_TILE_B = 512           # batch tile (per-call tunable, multiple of 8)
MATMUL_DTYPE = jnp.bfloat16    # bf16 MXU operands, f32 accumulation


def _round_up(n, m):
    return ((n + m - 1) // m) * m


def _pick_tile_b(batch, requested):
    """Largest tile <= requested, but keep grid length >= 2 when batch allows
    (v7x megacore sharding); always a multiple of 8."""
    half = _round_up(max((batch + 1) // 2, 8), 8)
    return max(8, min(_round_up(requested, 8), half))


def _elu(x):
    # ELU(alpha=1.0), matches torch.nn.ELU; exp arg clamped so the unselected
    # branch can't overflow.
    return jnp.where(x > 0, x, jnp.exp(jnp.minimum(x, 0.0)) - 1.0)


# ------------------------------- the kernel --------------------------------
def actor_ppo_gaussian_kernel(
    state_ref,     # [TB, S]   f32   (cast to bf16 in-kernel)
    eps_ref,       # [TB, OW]  f32   (N(0,1) noise, zero in cols >= A)
    w1_ref,        # [S,  H1]  bf16
    w2_ref,        # [H1, H2]  bf16
    wm_ref,        # [H2, OW]  bf16  (zero cols >= A)
    consts_ref,    # [8,  Wc]  f32   rows: b1, b2, bm, std, -1/(2var), log_norm
    out_ref,       # [TB, OW]  f32   cols [0,A): action, col A: log_prob
    *, h1, h2, out_w, action_dim,
):
    # unpack the packed constant rows (static slices of the resident tile)
    b1 = consts_ref[0:1, 0:h1]
    b2 = consts_ref[1:2, 0:h2]
    bm = consts_ref[2:3, 0:out_w]
    std = consts_ref[3:4, 0:out_w]
    neg_half_inv_var = consts_ref[4:5, 0:out_w]
    log_norm = consts_ref[5:6, 0:out_w]

    # backbone_net: Linear -> ELU -> Linear -> ELU (bf16 operands, f32 acc)
    x = state_ref[...].astype(MATMUL_DTYPE)           # in-kernel cast (VPU pack)
    h = _elu(jnp.dot(x, w1_ref[...], preferred_element_type=jnp.float32) + b1)
    h = _elu(jnp.dot(h.astype(MATMUL_DTYPE), w2_ref[...],
                     preferred_element_type=jnp.float32) + b2)

    # mean head (+ optional tanh squash, action_scale)
    mean = jnp.dot(h.astype(MATMUL_DTYPE), wm_ref[...],
                   preferred_element_type=jnp.float32) + bm
    if USE_ACTION_OUT_TANH:
        mean = ACTION_SCALE * jnp.tanh(mean)
    else:
        mean = ACTION_SCALE * mean

    # Normal(mean, std).rsample() using externally supplied N(0,1) noise
    # TODO(synk): could generate eps in-kernel via pltpu.prng_seed +
    # pltpu.stateful_normal if external-noise parity were not required.
    action = mean + std * eps_ref[...]
    if USE_ACTION_CLIP:
        action = jnp.clip(action, -ACTION_CLIP, ACTION_CLIP)

    # Normal.log_prob of the (clipped) action, summed over real action lanes
    diff = action - mean
    lp = diff * diff * neg_half_inv_var - log_norm
    col = jax.lax.broadcasted_iota(jnp.int32, lp.shape, 1)
    lp = jnp.where(col < action_dim, lp, 0.0)           # mask padded lanes
    lp_sum = jnp.sum(lp, axis=-1, keepdims=True)        # [TB, 1]

    # pack: action in cols [0, A), summed log_prob in col A
    out_ref[...] = jnp.where(col == action_dim, lp_sum, action).astype(out_ref.dtype)


# ------------------------------- the wrapper --------------------------------
def _resident(shape):
    # weights / constants: same block every grid step -> DMA'd once, resident
    return pl.BlockSpec(shape, lambda i: (0,) * len(shape))


def prepare_params(params):
    """One-time bf16 cast of matmul weights + small lane padding of the mean
    head to OW = round_up(A+1, 8) (col A of the output slab carries log_prob).
    Re-run whenever state/hidden/action dims change."""
    A = params["wm"].shape[1]
    ow = _round_up(A + 1, 8)

    def padc(x, c):
        return jnp.pad(x, ((0, 0), (0, c - x.shape[1])))

    return {
        "w1": params["w1"].astype(MATMUL_DTYPE),
        "b1": params["b1"].astype(jnp.float32),
        "w2": params["w2"].astype(MATMUL_DTYPE),
        "b2": params["b2"].astype(jnp.float32),
        "wm": padc(params["wm"], ow).astype(MATMUL_DTYPE),
        "bm": padc(params["bm"], ow).astype(jnp.float32),
        "log_std": padc(params["log_std"], ow).astype(jnp.float32),
    }


@partial(jax.jit, static_argnames=("action_dim", "tile_b"))
def actor_ppo_gaussian_forward(state, eps, pparams, *, action_dim,
                               tile_b=DEFAULT_TILE_B):
    """Returns (output_action [B, A], log_prob [B, 1]) — matches forward()."""
    B, S = state.shape
    A = action_dim
    H1 = pparams["w1"].shape[1]
    H2 = pparams["w2"].shape[1]
    OW = pparams["wm"].shape[1]          # round_up(A+1, 8)
    Wc = max(H1, H2, OW)

    tb = _pick_tile_b(B, tile_b)
    Bp = _round_up(B, tb)
    grid = (Bp // tb,)

    # batch-row padding only when needed (no lane padding of state)
    state = state.astype(jnp.float32)
    state_p = state if Bp == B else jnp.pad(state, ((0, Bp - B), (0, 0)))
    eps_p = jnp.pad(eps.astype(jnp.float32), ((0, Bp - B), (0, OW - A)))

    # per-call Normal constants, hoisted out of the per-tile kernel body,
    # packed with the biases into one resident [8, Wc] f32 operand
    log_std = pparams["log_std"]
    if USE_LOG_STD_CLIP:
        log_std = jnp.clip(log_std, LOG_STD_CLIP_MIN, LOG_STD_CLIP_MAX)
    std = jnp.exp(log_std)
    neg_half_inv_var = -0.5 * jnp.exp(-2.0 * log_std)
    log_norm = log_std + _LOG_SQRT_2PI

    def row(x):
        return jnp.pad(x, ((0, 0), (0, Wc - x.shape[1])))

    consts = jnp.concatenate(
        [row(pparams["b1"]), row(pparams["b2"]), row(pparams["bm"]),
         row(std), row(neg_half_inv_var), row(log_norm),
         jnp.zeros((2, Wc), jnp.float32)], axis=0)          # [8, Wc]

    def batch_spec(width):
        return pl.BlockSpec((tb, width), lambda i: (i, 0))

    # ---- VMEM budget (double-buffered streams + resident weights + interm) ----
    bytes_streamed = tb * (S * 4 + OW * 4 + OW * 4)          # state, eps, out
    bytes_resident = 2 * (S * H1 + H1 * H2 + H2 * OW) + 8 * Wc * 4
    bytes_interm = tb * max(H1, H2, OW) * 4 * 8              # f32 temporaries
    vmem_est = 2 * bytes_streamed + 2 * bytes_resident + bytes_interm
    vmem_limit = int(min(64 * 1024 * 1024,
                         max(2 * vmem_est, 16 * 1024 * 1024)))

    # ---- cost estimate with real (unpadded) footprint ----
    flops = 2 * B * (S * H1 + H1 * H2 + H2 * A)
    transcendentals = B * (H1 + H2 + A)                       # ELU exps + tanh
    bytes_accessed = int(B * S * 4 + 2 * B * OW * 4 + bytes_resident)

    slab = pl.pallas_call(
        partial(actor_ppo_gaussian_kernel,
                h1=H1, h2=H2, out_w=OW, action_dim=A),
        out_shape=jax.ShapeDtypeStruct((Bp, OW), jnp.float32),
        grid=grid,
        in_specs=[
            batch_spec(S),                # state tile  (f32, cast in-kernel)
            batch_spec(OW),               # eps tile
            _resident((S, H1)),           # w1
            _resident((H1, H2)),          # w2
            _resident((H2, OW)),          # wm
            _resident((8, Wc)),           # packed biases + Normal constants
        ],
        out_specs=batch_spec(OW),
        compiler_params=pltpu.CompilerParams(
            dimension_semantics=("parallel",),    # megacore on v7x
            vmem_limit_bytes=vmem_limit),
        cost_estimate=pl.CostEstimate(
            flops=flops,
            transcendentals=transcendentals,
            bytes_accessed=bytes_accessed),
    )(state_p, eps_p,
      pparams["w1"], pparams["w2"], pparams["wm"], consts)

    action = slab[:B, :A]
    log_prob = slab[:B, A:A + 1]
    return action, log_prob


# ---------------------- deterministic parameter init ------------------------
def init_params(key, state_dim, hidden_dims, action_dim):
    # TODO(synk): backbone depth fixed at 2 hidden layers (len(mlp_hidden_dims)==2);
    # deeper MLPs need extra matmul stages in the kernel.
    dims = [state_dim, *hidden_dims]
    keys = jax.random.split(key, len(dims) + 2)
    params = {}
    w_names = ["w1", "w2"]
    b_names = ["b1", "b2"]
    for i in range(len(dims) - 1):
        fan_in = dims[i]
        params[w_names[i]] = (
            jax.random.normal(keys[i], (dims[i], dims[i + 1]), jnp.float32)
            / jnp.sqrt(jnp.float32(fan_in)))
        params[b_names[i]] = jnp.zeros((1, dims[i + 1]), jnp.float32)
    # mean_layer (gain 0.01 like init_layers(self.mean_layer, gain=0.01))
    params["wm"] = 0.01 * jax.random.normal(
        keys[-2], (dims[-1], action_dim), jnp.float32) / jnp.sqrt(jnp.float32(dims[-1]))
    params["bm"] = jnp.zeros((1, action_dim), jnp.float32)
    params["log_std"] = jnp.zeros((1, action_dim), jnp.float32)
    return params
    # TODO(synk): value_layer / get_value / get_entropy / state_norm not exercised
    # by forward(); omitted.


# ----------------------------- pure-JAX reference ----------------------------
def reference_forward(state, params, eps):
    h = _elu(state @ params["w1"] + params["b1"])
    h = _elu(h @ params["w2"] + params["b2"])
    mean = h @ params["wm"] + params["bm"]
    if USE_ACTION_OUT_TANH:
        mean = ACTION_SCALE * jnp.tanh(mean)
    else:
        mean = ACTION_SCALE * mean
    log_std = params["log_std"]
    if USE_LOG_STD_CLIP:
        log_std = jnp.clip(log_std, LOG_STD_CLIP_MIN, LOG_STD_CLIP_MAX)
    std = jnp.exp(log_std)
    action = mean + std * eps
    if USE_ACTION_CLIP:
        action = jnp.clip(action, -ACTION_CLIP, ACTION_CLIP)
    lp = (-((action - mean) ** 2) / (2.0 * std * std) - log_std - _LOG_SQRT_2PI)
    return action, jnp.sum(lp, axis=-1, keepdims=True)


if __name__ == "__main__":
    # small but tiling-exercising sizes: tile_b picked at B//2=128 -> grid of 2
    B, STATE_DIM, HIDDEN, ACTION_DIM = 256, 32, [32, 32], 8

    key = jax.random.PRNGKey(0)
    k_state, k_eps, k_params = jax.random.split(key, 3)

    state = jax.random.normal(k_state, (B, STATE_DIM), jnp.float32)
    eps = jax.random.normal(k_eps, (B, ACTION_DIM), jnp.float32)  # rsample noise
    params = init_params(k_params, STATE_DIM, HIDDEN, ACTION_DIM)
    pparams = prepare_params(params)

    action, log_prob = actor_ppo_gaussian_forward(
        state, eps, pparams, action_dim=ACTION_DIM)
    jax.block_until_ready((action, log_prob))

    ref_action, ref_lp = reference_forward(state, params, eps)
    assert action.shape == (B, ACTION_DIM) and log_prob.shape == (B, 1)
    # bf16 matmul operands (f32 accumulation) -> relaxed tolerances vs f32 ref
    assert jnp.allclose(action, ref_action, atol=1e-2, rtol=1e-2), \
        float(jnp.max(jnp.abs(action - ref_action)))
    assert jnp.allclose(log_prob, ref_lp, atol=2e-2, rtol=1e-2), \
        float(jnp.max(jnp.abs(log_prob - ref_lp)))

    print("KERNEL_OK")
</pallas_src>

<mosaic_0001>
module attributes {stable_mosaic.version = 11 : i64} {
  func.func @actor_ppo_gaussian_kernel(%arg0: i32, %arg1: memref<128x32xf32, #tpu.memory_space<vmem>>, %arg2: memref<128x16xf32, #tpu.memory_space<vmem>>, %arg3: memref<32x32xbf16, #tpu.memory_space<vmem>>, %arg4: memref<32x32xbf16, #tpu.memory_space<vmem>>, %arg5: memref<32x16xbf16, #tpu.memory_space<vmem>>, %arg6: memref<8x32xf32, #tpu.memory_space<vmem>>, %arg7: memref<128x16xf32, #tpu.memory_space<vmem>>) attributes {dimension_semantics = [#tpu.dimension_semantics<parallel>], iteration_bounds = array<i64: 2>, scalar_prefetch = 0 : i64, scratch_operands = 0 : i64, tpu.core_type = #tpu.core_type<tc>, window_params = [{transform_indices = @transform_0, window_bounds = array<i64: 128, 32>}, {transform_indices = @transform_1, window_bounds = array<i64: 128, 16>}, {pipeline_mode = #tpu.pipeline_mode<synchronous>, transform_indices = @transform_2, window_bounds = array<i64: 32, 32>}, {pipeline_mode = #tpu.pipeline_mode<synchronous>, transform_indices = @transform_3, window_bounds = array<i64: 32, 32>}, {pipeline_mode = #tpu.pipeline_mode<synchronous>, transform_indices = @transform_4, window_bounds = array<i64: 32, 16>}, {pipeline_mode = #tpu.pipeline_mode<synchronous>, transform_indices = @transform_5, window_bounds = array<i64: 8, 32>}, {transform_indices = @transform_6, window_bounds = array<i64: 128, 16>}]} {
    %c0 = arith.constant 0 : index
    %c0_0 = arith.constant 0 : index
    %0 = vector.load %arg6[%c0, %c0_0] : memref<8x32xf32, #tpu.memory_space<vmem>>, vector<1x32xf32>
    %c1 = arith.constant 1 : index
    %c0_1 = arith.constant 0 : index
    %1 = vector.load %arg6[%c1, %c0_1] : memref<8x32xf32, #tpu.memory_space<vmem>>, vector<1x32xf32>
    %c2 = arith.constant 2 : index
    %c0_2 = arith.constant 0 : index
    %2 = vector.load %arg6[%c2, %c0_2] : memref<8x32xf32, #tpu.memory_space<vmem>>, vector<1x16xf32>
    %c3 = arith.constant 3 : index
    %c0_3 = arith.constant 0 : index
    %3 = vector.load %arg6[%c3, %c0_3] : memref<8x32xf32, #tpu.memory_space<vmem>>, vector<1x16xf32>
    %c4 = arith.constant 4 : index
    %c0_4 = arith.constant 0 : index
    %4 = vector.load %arg6[%c4, %c0_4] : memref<8x32xf32, #tpu.memory_space<vmem>>, vector<1x16xf32>
    %c5 = arith.constant 5 : index
    %c0_5 = arith.constant 0 : index
    %5 = vector.load %arg6[%c5, %c0_5] : memref<8x32xf32, #tpu.memory_space<vmem>>, vector<1x16xf32>
    %c0_6 = arith.constant 0 : index
    %c0_7 = arith.constant 0 : index
    %6 = vector.load %arg1[%c0_6, %c0_7] : memref<128x32xf32, #tpu.memory_space<vmem>>, vector<128x32xf32>
    %7 = arith.truncf %6 : vector<128x32xf32> to vector<128x32xbf16>
    %c0_8 = arith.constant 0 : index
    %c0_9 = arith.constant 0 : index
    %8 = vector.load %arg3[%c0_8, %c0_9] : memref<32x32xbf16, #tpu.memory_space<vmem>>, vector<32x32xbf16>
    %cst = arith.constant dense<0.000000e+00> : vector<128x32xf32>
    %9 = tpu.matmul %7, %8, %cst {dimension_numbers = #tpu.dot_dimension_numbers<[1], [0], [0], [1], [0, 0, 1, 1], [], []>} : vector<128x32xbf16>, vector<32x32xbf16>, vector<128x32xf32> -> vector<128x32xf32>
    %10 = vector.broadcast %0 : vector<1x32xf32> to vector<128x32xf32>
    %11 = arith.addf %9, %10 : vector<128x32xf32>
    %cst_10 = arith.constant 0.000000e+00 : f32
    %12 = vector.broadcast %cst_10 : f32 to vector<128x32xf32>
    %13 = arith.cmpf ogt, %11, %12 : vector<128x32xf32>
    %cst_11 = arith.constant 0.000000e+00 : f32
    %14 = vector.broadcast %cst_11 : f32 to vector<128x32xf32>
    %15 = arith.minimumf %11, %14 : vector<128x32xf32>
    %16 = math.exp %15 : vector<128x32xf32>
    %cst_12 = arith.constant 1.000000e+00 : f32
    %17 = vector.broadcast %cst_12 : f32 to vector<128x32xf32>
    %18 = arith.subf %16, %17 : vector<128x32xf32>
    %19 = arith.select %13, %11, %18 : vector<128x32xi1>, vector<128x32xf32>
    %20 = arith.truncf %19 : vector<128x32xf32> to vector<128x32xbf16>
    %c0_13 = arith.constant 0 : index
    %c0_14 = arith.constant 0 : index
    %21 = vector.load %arg4[%c0_13, %c0_14] : memref<32x32xbf16, #tpu.memory_space<vmem>>, vector<32x32xbf16>
    %cst_15 = arith.constant dense<0.000000e+00> : vector<128x32xf32>
    %22 = tpu.matmul %20, %21, %cst_15 {dimension_numbers = #tpu.dot_dimension_numbers<[1], [0], [0], [1], [0, 0, 1, 1], [], []>} : vector<128x32xbf16>, vector<32x32xbf16>, vector<128x32xf32> -> vector<128x32xf32>
    %23 = vector.broadcast %1 : vector<1x32xf32> to vector<128x32xf32>
    %24 = arith.addf %22, %23 : vector<128x32xf32>
    %cst_16 = arith.constant 0.000000e+00 : f32
    %25 = vector.broadcast %cst_16 : f32 to vector<128x32xf32>
    %26 = arith.cmpf ogt, %24, %25 : vector<128x32xf32>
    %cst_17 = arith.constant 0.000000e+00 : f32
    %27 = vector.broadcast %cst_17 : f32 to vector<128x32xf32>
    %28 = arith.minimumf %24, %27 : vector<128x32xf32>
    %29 = math.exp %28 : vector<128x32xf32>
    %cst_18 = arith.constant 1.000000e+00 : f32
    %30 = vector.broadcast %cst_18 : f32 to vector<128x32xf32>
    %31 = arith.subf %29, %30 : vector<128x32xf32>
    %32 = arith.select %26, %24, %31 : vector<128x32xi1>, vector<128x32xf32>
    %33 = arith.truncf %32 : vector<128x32xf32> to vector<128x32xbf16>
    %c0_19 = arith.constant 0 : index
    %c0_20 = arith.constant 0 : index
    %34 = vector.load %arg5[%c0_19, %c0_20] : memref<32x16xbf16, #tpu.memory_space<vmem>>, vector<32x16xbf16>
    %cst_21 = arith.constant dense<0.000000e+00> : vector<128x16xf32>
    %35 = tpu.matmul %33, %34, %cst_21 {dimension_numbers = #tpu.dot_dimension_numbers<[1], [0], [0], [1], [0, 0, 1, 1], [], []>} : vector<128x32xbf16>, vector<32x16xbf16>, vector<128x16xf32> -> vector<128x16xf32>
    %36 = vector.broadcast %2 : vector<1x16xf32> to vector<128x16xf32>
    %37 = arith.addf %35, %36 : vector<128x16xf32>
    %38 = math.tanh %37 : vector<128x16xf32>
    %cst_22 = arith.constant 1.000000e+00 : f32
    %39 = vector.broadcast %cst_22 : f32 to vector<128x16xf32>
    %40 = arith.mulf %39, %38 : vector<128x16xf32>
    %c0_23 = arith.constant 0 : index
    %c0_24 = arith.constant 0 : index
    %41 = vector.load %arg2[%c0_23, %c0_24] : memref<128x16xf32, #tpu.memory_space<vmem>>, vector<128x16xf32>
    %42 = vector.broadcast %3 : vector<1x16xf32> to vector<128x16xf32>
    %43 = arith.mulf %42, %41 : vector<128x16xf32>
    %44 = arith.addf %40, %43 : vector<128x16xf32>
    %cst_25 = arith.constant -1.000000e+00 : f32
    %cst_26 = arith.constant 1.000000e+00 : f32
    %45 = vector.broadcast %cst_25 : f32 to vector<128x16xf32>
    %46 = arith.maximumf %45, %44 : vector<128x16xf32>
    %47 = vector.broadcast %cst_26 : f32 to vector<128x16xf32>
    %48 = arith.minimumf %47, %46 : vector<128x16xf32>
    %49 = arith.subf %48, %40 : vector<128x16xf32>
    %50 = arith.mulf %49, %49 : vector<128x16xf32>
    %51 = vector.broadcast %4 : vector<1x16xf32> to vector<128x16xf32>
    %52 = arith.mulf %50, %51 : vector<128x16xf32>
    %53 = vector.broadcast %5 : vector<1x16xf32> to vector<128x16xf32>
    %54 = arith.subf %52, %53 : vector<128x16xf32>
    %55 = tpu.iota {dimensions = array<i32: 1>} : vector<128x16xi32>
    %c8_i32 = arith.constant 8 : i32
    %56 = vector.broadcast %c8_i32 : i32 to vector<128x16xi32>
    %57 = arith.cmpi slt, %55, %56 : vector<128x16xi32>
    %cst_27 = arith.constant 0.000000e+00 : f32
    %58 = vector.broadcast %cst_27 : f32 to vector<128x16xf32>
    %59 = arith.select %57, %54, %58 : vector<128x16xi1>, vector<128x16xf32>
    %cst_28 = arith.constant dense<0.000000e+00> : vector<128xf32>
    %60 = vector.multi_reduction <add>, %59, %cst_28 [1] : vector<128x16xf32> to vector<128xf32>
    %61 = vector.shape_cast %60 : vector<128xf32> to vector<128x1xf32>
    %c8_i32_29 = arith.constant 8 : i32
    %62 = vector.broadcast %c8_i32_29 : i32 to vector<128x16xi32>
    %63 = arith.cmpi eq, %55, %62 : vector<128x16xi32>
    %64 = vector.shape_cast %61 : vector<128x1xf32> to vector<128x1xf32>
    %65 = vector.broadcast %64 : vector<128x1xf32> to vector<128x16xf32>
    %66 = arith.select %63, %65, %48 : vector<128x16xi1>, vector<128x16xf32>
    %c0_30 = arith.constant 0 : index
    %c0_31 = arith.constant 0 : index
    %67 = vector.load %arg7[%c0_30, %c0_31] : memref<128x16xf32, #tpu.memory_space<vmem>>, vector<128x16xf32>
    tpu.vector_store %arg7[%c0_30, %c0_31], %66 {strides = array<i32>} : memref<128x16xf32, #tpu.memory_space<vmem>>, vector<128x16xf32>,
    return
  }
  func.func @transform_0(%arg0: i32) -> (i32, i32) {
    %c0_i32 = arith.constant 0 : i32
    %c0_i32_0 = arith.constant 0 : i32
    return %arg0, %c0_i32 : i32, i32
  }
  func.func @transform_1(%arg0: i32) -> (i32, i32) {
    %c0_i32 = arith.constant 0 : i32
    %c0_i32_0 = arith.constant 0 : i32
    return %arg0, %c0_i32 : i32, i32
  }
  func.func @transform_2(%arg0: i32) -> (i32, i32) {
    %c0_i32 = arith.constant 0 : i32
    %c0_i32_0 = arith.constant 0 : i32
    %c0_i32_1 = arith.constant 0 : i32
    return %c0_i32, %c0_i32_0 : i32, i32
  }
  func.func @transform_3(%arg0: i32) -> (i32, i32) {
    %c0_i32 = arith.constant 0 : i32
    %c0_i32_0 = arith.constant 0 : i32
    %c0_i32_1 = arith.constant 0 : i32
    return %c0_i32, %c0_i32_0 : i32, i32
  }
  func.func @transform_4(%arg0: i32) -> (i32, i32) {
    %c0_i32 = arith.constant 0 : i32
    %c0_i32_0 = arith.constant 0 : i32
    %c0_i32_1 = arith.constant 0 : i32
    return %c0_i32, %c0_i32_0 : i32, i32
  }
  func.func @transform_5(%arg0: i32) -> (i32, i32) {
    %c0_i32 = arith.constant 0 : i32
    %c0_i32_0 = arith.constant 0 : i32
    %c0_i32_1 = arith.constant 0 : i32
    return %c0_i32, %c0_i32_0 : i32, i32
  }
  func.func @transform_6(%arg0: i32) -> (i32, i32) {
    %c0_i32 = arith.constant 0 : i32
    %c0_i32_0 = arith.constant 0 : i32
    return %arg0, %c0_i32 : i32, i32
  }
}

</mosaic_0001>

<llo_original>
// kernel: actor_ppo_gaussian_forward.1
$region0: #{actor_ppo_gaussian_forward.1}
  #allocation0 [shape = 'u32[]', space=smem, size = 0x4, offset = 0x4, fixed_abs, tag = 'smem constant byte address 0x4 - core index']
  #allocation1 [shape = 'u32[144,128]{1,0:T(1,128)}', space=vmem, size = 0x12000, scoped, tag = 'internal scratch']
  %s0 = inlined_call_operand.vmem [shape: f32[256,32], index: 0, kind: input, shape index: {}]
  %s1 = inlined_call_operand.vmem [shape: f32[256,16], index: 1, kind: input, shape index: {}]
  %s2 = inlined_call_operand.vmem [shape: bf16[32,32], index: 2, kind: input, shape index: {}]
  %s3 = inlined_call_operand.vmem [shape: bf16[32,32], index: 3, kind: input, shape index: {}]
  %s4 = inlined_call_operand.vmem [shape: bf16[32,16], index: 4, kind: input, shape index: {}]
  %s5 = inlined_call_operand.vmem [shape: f32[8,32], index: 5, kind: input, shape index: {}]
  %s6 = inlined_call_operand.vmem [shape: f32[256,16], index: 6, kind: output, shape index: {}]
  %s7 = sld [smem:[#allocation0]]
  $region57: #{actor_ppo_gaussian_forward.1} parent=0
    _
  %s9 = ssub.s32 1, %s7
  %s10 = scalar_select 0, %s9, %s7
  loop: start=0, step=1, limit=4
  $region2: #{actor_ppo_gaussian_forward.1} parent=0 // loop_pre_header
    _
  $region3: #{actor_ppo_gaussian_forward.1} parent=0 // loop_header
    %s12 = sphi 0, %s16
    %p13 = scmp.ge.s32.totalorder %s12, 4
    %s22 = sphi 0, %s24
    %s25 = sphi 0, %s22
    %s26 = sphi 0, %s25
    %s42 = sphi 0, %s26
    %s48 = sphi 0, %s50
    %s51 = sphi 0, %s48
    %s52 = sphi 0, %s51
    %s68 = sphi 0, %s52
    %s72 = sphi 0, %s72
    %s74 = sphi 0, %s72
    %s75 = sphi 0, %s74
    %s89 = sphi 0, %s75
    %s93 = sphi 0, %s93
    %s95 = sphi 0, %s93
    %s96 = sphi 0, %s95
    %s110 = sphi 0, %s96
    %s114 = sphi 0, %s114
    %s116 = sphi 0, %s114
    %s117 = sphi 0, %s116
    %s131 = sphi 0, %s117
    %s135 = sphi 0, %s135
    %s137 = sphi 0, %s135
    %s138 = sphi 0, %s137
    %s152 = sphi 0, %s138
    %s158 = sphi 0, %s160
    %s161 = sphi 0, %s158
    %s162 = sphi 0, %s161
    %s178 = sphi 0, %s162
  $region4: #{actor_ppo_gaussian_forward.1} parent=0 // loop_header_branch
    %15 = sbr.rel (%p13) target = $region8
  $region5: #{actor_ppo_gaussian_forward.1} parent=0 // loop_body
    %s17 = ssub.s32 %s12, 1
    %s18 = ssub.s32 %s12, 2
    %s19 = sadd.s32 %s12, 1
    %s20 = ssub.s32 %s12, %s19
    %p21 = scmp.eq.s32.totalorder %s20, 0
    %s23 = sadd.s32 %s22, 1
    %s24 = scalar_select %p21, %s22, %s23
    %p27 = pneg %p21
    %p28 = scmp.eq.s32.totalorder %s12, 1
    %p29 = por %p27, %p28
    %p30 = scmp.ne.s32.totalorder %s22, %s25
    %p31 = scmp.eq.s32.totalorder %s12, 0
    %p32 = por %p30, %p31
    %p33 = scmp.ne.s32.totalorder %s22, %s25
    %p34 = scmp.eq.s32.totalorder %s17, 1
    %p35 = por %p33, %p34
    %p36 = scmp.ne.s32.totalorder %s25, %s26
    %p37 = scmp.eq.s32.totalorder %s17, 0
    %p38 = por %p36, %p37
    %p39 = scmp.ne.s32.totalorder %s25, %s26
    %p40 = scmp.eq.s32.totalorder %s18, 1
    %p41 = por %p39, %p40
    %p43 = scmp.ne.s32.totalorder %s26, %s42
    %p44 = scmp.eq.s32.totalorder %s18, 0
    %p45 = por %p43, %p44
    %s46 = ssub.s32 %s12, %s19
    %p47 = scmp.eq.s32.totalorder %s46, 0
    %s49 = sadd.s32 %s48, 1
    %s50 = scalar_select %p47, %s48, %s49
    %p53 = pneg %p47
    %p54 = scmp.eq.s32.totalorder %s12, 1
    %p55 = por %p53, %p54
    %p56 = scmp.ne.s32.totalorder %s48, %s51
    %p57 = scmp.eq.s32.totalorder %s12, 0
    %p58 = por %p56, %p57
    %p59 = scmp.ne.s32.totalorder %s48, %s51
    %p60 = scmp.eq.s32.totalorder %s17, 1
    %p61 = por %p59, %p60
    %p62 = scmp.ne.s32.totalorder %s51, %s52
    %p63 = scmp.eq.s32.totalorder %s17, 0
    %p64 = por %p62, %p63
    %p65 = scmp.ne.s32.totalorder %s51, %s52
    %p66 = scmp.eq.s32.totalorder %s18, 1
    %p67 = por %p65, %p66
    %p69 = scmp.ne.s32.totalorder %s52, %s68
    %p70 = scmp.eq.s32.totalorder %s18, 0
    %p71 = por %p69, %p70
    %s73 = sadd.s32 %s72, 1
    %p76 = scmp.eq.s32.totalorder %s12, 1
    %p77 = scmp.ne.s32.totalorder %s72, %s74
    %p78 = scmp.eq.s32.totalorder %s12, 0
    %p79 = por %p77, %p78
    %p80 = scmp.ne.s32.totalorder %s72, %s74
    %p81 = scmp.eq.s32.totalorder %s17, 1
    %p82 = por %p80, %p81
    %p83 = scmp.ne.s32.totalorder %s74, %s75
    %p84 = scmp.eq.s32.totalorder %s17, 0
    %p85 = por %p83, %p84
    %p86 = scmp.ne.s32.totalorder %s74, %s75
    %p87 = scmp.eq.s32.totalorder %s18, 1
    %p88 = por %p86, %p87
    %p90 = scmp.ne.s32.totalorder %s75, %s89
    %p91 = scmp.eq.s32.totalorder %s18, 0
    %p92 = por %p90, %p91
    %s94 = sadd.s32 %s93, 1
    %p97 = scmp.eq.s32.totalorder %s12, 1
    %p98 = scmp.ne.s32.totalorder %s93, %s95
    %p99 = scmp.eq.s32.totalorder %s12, 0
    %p100 = por %p98, %p99
    %p101 = scmp.ne.s32.totalorder %s93, %s95
    %p102 = scmp.eq.s32.totalorder %s17, 1
    %p103 = por %p101, %p102
    %p104 = scmp.ne.s32.totalorder %s95, %s96
    %p105 = scmp.eq.s32.totalorder %s17, 0
    %p106 = por %p104, %p105
    %p107 = scmp.ne.s32.totalorder %s95, %s96
    %p108 = scmp.eq.s32.totalorder %s18, 1
    %p109 = por %p107, %p108
    %p111 = scmp.ne.s32.totalorder %s96, %s110
    %p112 = scmp.eq.s32.totalorder %s18, 0
    %p113 = por %p111, %p112
    %s115 = sadd.s32 %s114, 1
    %p118 = scmp.eq.s32.totalorder %s12, 1
    %p119 = scmp.ne.s32.totalorder %s114, %s116
    %p120 = scmp.eq.s32.totalorder %s12, 0
    %p121 = por %p119, %p120
    %p122 = scmp.ne.s32.totalorder %s114, %s116
    %p123 = scmp.eq.s32.totalorder %s17, 1
    %p124 = por %p122, %p123
    %p125 = scmp.ne.s32.totalorder %s116, %s117
    %p126 = scmp.eq.s32.totalorder %s17, 0
    %p127 = por %p125, %p126
    %p128 = scmp.ne.s32.totalorder %s116, %s117
    %p129 = scmp.eq.s32.totalorder %s18, 1
    %p130 = por %p128, %p129
    %p132 = scmp.ne.s32.totalorder %s117, %s131
    %p133 = scmp.eq.s32.totalorder %s18, 0
    %p134 = por %p132, %p133
    %s136 = sadd.s32 %s135, 1
    %p139 = scmp.eq.s32.totalorder %s12, 1
    %p140 = scmp.ne.s32.totalorder %s135, %s137
    %p141 = scmp.eq.s32.totalorder %s12, 0
    %p142 = por %p140, %p141
    %p143 = scmp.ne.s32.totalorder %s135, %s137
    %p144 = scmp.eq.s32.totalorder %s17, 1
    %p145 = por %p143, %p144
    %p146 = scmp.ne.s32.totalorder %s137, %s138
    %p147 = scmp.eq.s32.totalorder %s17, 0
    %p148 = por %p146, %p147
    %p149 = scmp.ne.s32.totalorder %s137, %s138
    %p150 = scmp.eq.s32.totalorder %s18, 1
    %p151 = por %p149, %p150
    %p153 = scmp.ne.s32.totalorder %s138, %s152
    %p154 = scmp.eq.s32.totalorder %s18, 0
    %p155 = por %p153, %p154
    %s156 = ssub.s32 %s12, %s19
    %p157 = scmp.eq.s32.totalorder %s156, 0
    %s159 = sadd.s32 %s158, 1
    %s160 = scalar_select %p157, %s158, %s159
    %p163 = pneg %p157
    %p164 = scmp.eq.s32.totalorder %s12, 1
    %p165 = por %p163, %p164
    %p166 = scmp.ne.s32.totalorder %s158, %s161
    %p167 = scmp.eq.s32.totalorder %s12, 0
    %p168 = por %p166, %p167
    %p169 = scmp.ne.s32.totalorder %s158, %s161
    %p170 = scmp.eq.s32.totalorder %s17, 1
    %p171 = por %p169, %p170
    %p172 = scmp.ne.s32.totalorder %s161, %s162
    %p173 = scmp.eq.s32.totalorder %s17, 0
    %p174 = por %p172, %p173
    %p175 = scmp.ne.s32.totalorder %s161, %s162
    %p176 = scmp.eq.s32.totalorder %s18, 1
    %p177 = por %p175, %p176
    %p179 = scmp.ne.s32.totalorder %s162, %s178
    %p180 = scmp.eq.s32.totalorder %s18, 0
    %p181 = por %p179, %p180
    %p182 = scmp.le.s32.totalorder 1, %s12
    %p183 = scmp.lt.s32.totalorder %s12, 3
    %p184 = pnand %p182, %p183
    %p185 = pneg %p184
    // Predicated region
    $region9: #{actor_ppo_gaussian_forward.1} parent=5 // pred_check
      _
    $region10: #{actor_ppo_gaussian_forward.1} parent=5 // pred_check_branch
      %187 = sbr.rel (%p184) target = $region12
    $region11: #{actor_ppo_gaussian_forward.1} parent=5 // pred_region
      %s188 = ssub.s32 %s12, 1
      // Predicated region
      $region13: #{actor_ppo_gaussian_forward.1} parent=11 // pred_check
        %p189 = pneg %p85
      $region14: #{actor_ppo_gaussian_forward.1} parent=11 // pred_check_branch
        %191 = sbr.rel (%p189) target = $region16
      $region15: #{actor_ppo_gaussian_forward.1} parent=11 // pred_region
        _
      $region16: #{actor_ppo_gaussian_forward.1} parent=11 // pred_fallthru
        _
      // Predicated region
      $region17: #{actor_ppo_gaussian_forward.1} parent=11 // pred_check
        %p192 = pneg %p106
      $region18: #{actor_ppo_gaussian_forward.1} parent=11 // pred_check_branch
        %194 = sbr.rel (%p192) target = $region20
      $region19: #{actor_ppo_gaussian_forward.1} parent=11 // pred_region
        _
      $region20: #{actor_ppo_gaussian_forward.1} parent=11 // pred_fallthru
        _
      // Predicated region
      $region21: #{actor_ppo_gaussian_forward.1} parent=11 // pred_check
        %p195 = pneg %p127
      $region22: #{actor_ppo_gaussian_forward.1} parent=11 // pred_check_branch
        %197 = sbr.rel (%p195) target = $region24
      $region23: #{actor_ppo_gaussian_forward.1} parent=11 // pred_region
        _
      $region24: #{actor_ppo_gaussian_forward.1} parent=11 // pred_fallthru
        _
      // Predicated region
      $region25: #{actor_ppo_gaussian_forward.1} parent=11 // pred_check
        %p198 = pneg %p148
      $region26: #{actor_ppo_gaussian_forward.1} parent=11 // pred_check_branch
        %200 = sbr.rel (%p198) target = $region28
      $region27: #{actor_ppo_gaussian_forward.1} parent=11 // pred_region
        _
      $region28: #{actor_ppo_gaussian_forward.1} parent=11 // pred_fallthru
        _
    $region12: #{actor_ppo_gaussian_forward.1} parent=5 // pred_fallthru
      _
    %p201 = scmp.lt.s32.totalorder %s12, 2
    // Predicated region
    $region29: #{actor_ppo_gaussian_forward.1} parent=5 // pred_check
      %p202 = pneg %p201
    $region30: #{actor_ppo_gaussian_forward.1} parent=5 // pred_check_branch
      %204 = sbr.rel (%p202) target = $region32
    $region31: #{actor_ppo_gaussian_forward.1} parent=5 // pred_region
      // Predicated region
      $region33: #{actor_ppo_gaussian_forward.1} parent=31 // pred_check
        %p205 = pneg %p32
      $region34: #{actor_ppo_gaussian_forward.1} parent=31 // pred_check_branch
        %207 = sbr.rel (%p205) target = $region36
      $region35: #{actor_ppo_gaussian_forward.1} parent=31 // pred_region
        %s208 = smul.u32 16, %s12
        %p209 = scmp.lt.s32.totalorder %s208, 31
        %s210 = scalar_select %p209, %s208, 31
        %s211 = smul.addr %s210, 8
        %s212 = scalar_lea.vmem %s0, %s211
        %s213 = smul.u32 16, %s12
      $region36: #{actor_ppo_gaussian_forward.1} parent=31 // pred_fallthru
        _
      // Predicated region
      $region37: #{actor_ppo_gaussian_forward.1} parent=31 // pred_check
        %p214 = pneg %p58
      $region38: #{actor_ppo_gaussian_forward.1} parent=31 // pred_check_branch
        %216 = sbr.rel (%p214) target = $region40
      $region39: #{actor_ppo_gaussian_forward.1} parent=31 // pred_region
        %s217 = smul.u32 16, %s12
        %p218 = scmp.lt.s32.totalorder %s217, 31
        %s219 = scalar_select %p218, %s217, 31
        %s220 = smul.addr %s219, 8
        %s221 = scalar_lea.vmem %s1, %s220
        %s222 = smul.u32 16, %s12
      $region40: #{actor_ppo_gaussian_forward.1} parent=31 // pred_fallthru
        _
    $region32: #{actor_ppo_gaussian_forward.1} parent=5 // pred_fallthru
      _
    %p223 = scmp.le.s32.totalorder 1, %s12
    %p224 = scmp.lt.s32.totalorder %s12, 3
    %p225 = pnand %p223, %p224
    %p226 = pneg %p225
    // Predicated region
    $region41: #{actor_ppo_gaussian_forward.1} parent=5 // pred_check
      _
    $region42: #{actor_ppo_gaussian_forward.1} parent=5 // pred_check_branch
      %228 = sbr.rel (%p225) target = $region44
    $region43: #{actor_ppo_gaussian_forward.1} parent=5 // pred_region
      %s229 = ssub.s32 %s12, 1
      %s230 = smul.u32 16, %s17
      %p231 = scmp.lt.s32.totalorder %s230, 31
      %s232 = scalar_select %p231, %s230, 31
      %s233 = smul.addr %s232, 8
      %s234 = scalar_lea.vmem %s0, %s233
      %p235 = pneg %p38
      %p236 = pneg %p35
      %s237 = smul.u32 16, %s17
      %p238 = scmp.lt.s32.totalorder %s237, 31
      %s239 = scalar_select %p238, %s237, 31
      %s240 = smul.addr %s239, 8
      %s241 = scalar_lea.vmem %s1, %s240
      %p242 = pneg %p64
      %p243 = pneg %p61
      %p244 = pneg %p85
      %p245 = pneg %p82
      %p246 = pneg %p106
      %p247 = pneg %p103
      %p248 = pneg %p127
      %p249 = pneg %p124
      %p250 = pneg %p148
      %p251 = pneg %p145
      %p252 = pneg %p174
      %p253 = pneg %p171
      %s254 = smul.u32 16, %s17
      %p255 = scmp.lt.s32.totalorder %s254, 31
      %s256 = scalar_select %p255, %s254, 31
      %s257 = smul.addr %s256, 8
      %s258 = scalar_lea.vmem %s6, %s257
      %s259 = smul.u32 16, %s17
      %p260 = scmp.lt.s32.totalorder %s259, 31
      %s261 = scalar_select %p260, %s259, 31
      %s262 = smul.addr %s261, 8
      %s263 = scalar_lea.vmem %s0, %s262
      %s264 = smul.u32 16, %s17
      %s265 = smul.u32 16, %s17
      %p266 = scmp.lt.s32.totalorder %s265, 31
      %s267 = scalar_select %p266, %s265, 31
      %s268 = smul.addr %s267, 8
      %s269 = scalar_lea.vmem %s1, %s268
      %s270 = smul.u32 16, %s17
      %s271 = smul.u32 16, %s17
      %p272 = scmp.lt.s32.totalorder %s271, 31
      %s273 = scalar_select %p272, %s271, 31
      %s274 = smul.addr %s273, 8
      %s275 = scalar_lea.vmem %s6, %s274
      %s276 = smul.u32 16, %s17
      %v278 = vld [vmem:[%s5] sm:$0x1]
      %v279 = vld [vmem:[%s5 + $0x1] sm:$0x1]
      %v280 = vld [vmem:[%s5 + $0x2] sm:$0x1]
      %v281 = vld [vmem:[%s5 + $0x3] sm:$0x1]
      %v282 = vld [vmem:[%s5 + $0x4] sm:$0x1]
      %v283 = vld [vmem:[%s5 + $0x5] sm:$0x1]
      %v284 = vld [vmem:[%s263] sm:$0xff]
      %v285 = vld [vmem:[%s263 + $0x8] sm:$0xff]
      %v286 = vld [vmem:[%s263 + $0x10] sm:$0xff]
      %v287 = vld [vmem:[%s263 + $0x18] sm:$0xff]
      %v288 = vld [vmem:[%s263 + $0x20] sm:$0xff]
      %v289 = vld [vmem:[%s263 + $0x28] sm:$0xff]
      %v290 = vld [vmem:[%s263 + $0x30] sm:$0xff]
      %v291 = vld [vmem:[%s263 + $0x38] sm:$0xff]
      %v292 = vld [vmem:[%s263 + $0x40] sm:$0xff]
      %v293 = vld [vmem:[%s263 + $0x48] sm:$0xff]
      %v294 = vld [vmem:[%s263 + $0x50] sm:$0xff]
      %v295 = vld [vmem:[%s263 + $0x58] sm:$0xff]
      %v296 = vld [vmem:[%s263 + $0x60] sm:$0xff]
      %v297 = vld [vmem:[%s263 + $0x68] sm:$0xff]
      %v298 = vld [vmem:[%s263 + $0x70] sm:$0xff]
      %v299 = vld [vmem:[%s263 + $0x78] sm:$0xff]
      %v300 = vpack.c.bf16 %v285, %v284
      %v301 = vpack.c.bf16 %v287, %v286
      %v302 = vpack.c.bf16 %v289, %v288
      %v303 = vpack.c.bf16 %v291, %v290
      %v304 = vpack.c.bf16 %v293, %v292
      %v305 = vpack.c.bf16 %v295, %v294
      %v306 = vpack.c.bf16 %v297, %v296
      %v307 = vpack.c.bf16 %v299, %v298
      %v308 = vld [vmem:[%s2] sm:$0xf]
      %v309 = vld [vmem:[%s2 + $0x4] sm:$0xf]
      %v310 = vld [vmem:[%s2 + $0x8] sm:$0xf]
      %v311 = vld [vmem:[%s2 + $0xc] sm:$0xf]
      %v312 = vlaneseq
      %v313 = vshrl.u32 %v312, 7
      %v314 = vsub.s32 0, %v313
      %v315 = vrot.slane %v278, %v314
      %v320 = vunpack.c.l.b16 %v308
      %v321 = vunpack.c.l.b16 %v309
      %v322 = vunpack.c.l.b16 %v310
      %v323 = vunpack.c.l.b16 %v311
      %v324 = vpack.c.b16 %v321, %v320
      %v325 = vpack.c.b16 %v323, %v322
      %vm328 = vcmask 261120
      %v330 = vsel %vm328, %v300, 0
      %v333 = vsel %vm328, %v301, 0
      %v336 = vsel %vm328, %v302, 0
      %v339 = vsel %vm328, %v303, 0
      %v342 = vsel %vm328, %v304, 0
      %v345 = vsel %vm328, %v305, 0
      %v348 = vsel %vm328, %v306, 0
      %v351 = vsel %vm328, %v307, 0
      %353 = vmatprep.subr.bf16.mxu0 0
      %354 = vmatpush1.bf16.msra.mxu0 %v324
      %355 = vmatprep.subr.bf16.mxu0 0
      %356 = vmatpush1.bf16.msra.mxu0 %v325
      %357 = vmatprep.subr.bf16.mxu0 0
      %358 = vmatpush1.bf16.msra.mxu0 0
      %359 = vmatprep.subr.bf16.mxu0 0
      %360 = vmatpush1.bf16.msra.mxu0 0
      %361 = vmatprep.subr.bf16.mxu0 0
      %362 = vmatpush1.bf16.msra.mxu0 0
      %363 = vmatprep.subr.bf16.mxu0 0
      %364 = vmatpush1.bf16.msra.mxu0 0
      %365 = vmatprep.subr.bf16.mxu0 0
      %366 = vmatpush1.bf16.msra.mxu0 0
      %367 = vmatprep.subr.bf16.mxu0 0
      %368 = vmatpush1.bf16.msra.mxu0 0
      %369 = vmatprep.subr.bf16.mxu0 0
      %370 = vmatpush1.bf16.msra.mxu0 0
      %371 = vmatprep.subr.bf16.mxu0 0
      %372 = vmatpush1.bf16.msra.mxu0 0
      %373 = vmatprep.subr.bf16.mxu0 0
      %374 = vmatpush1.bf16.msra.mxu0 0
      %375 = vmatprep.subr.bf16.mxu0 0
      %376 = vmatpush1.bf16.msra.mxu0 0
      %377 = vmatprep.subr.bf16.mxu0 0
      %378 = vmatpush1.bf16.msra.mxu0 0
      %379 = vmatprep.subr.bf16.mxu0 0
      %380 = vmatpush1.bf16.msra.mxu0 0
      %381 = vmatprep.subr.bf16.mxu0 0
      %382 = vmatpush1.bf16.msra.mxu0 0
      %383 = vmatprep.subr.bf16.mxu0 0
      %384 = vmatpush1.bf16.msra.mxu0 0
      %385 = vmatprep.mubr.bf16.mxu0 0
      %386 = vmatmul.mubr.bf16.gmra.mrb[0].mxu0 %v330
      %v387 = vpop.f32.mrb[0].mxu0
      %v388 = vadd.f32 %v315, %v387
      %v389 = vpop.f32.mrb[0].mxu0
      %v390 = vpop.f32.mrb[0].mxu0
      %v391 = vadd.f32 %v315, %v390
      %v392 = vpop.f32.mrb[0].mxu0
      %393 = vmatprep.mubr.bf16.mxu0 0
      %394 = vmatmul.mubr.bf16.gmra.mrb[0].mxu0 %v333
      %v395 = vpop.f32.mrb[0].mxu0
      %v396 = vadd.f32 %v315, %v395
      %v397 = vpop.f32.mrb[0].mxu0
      %v398 = vpop.f32.mrb[0].mxu0
      %v399 = vadd.f32 %v315, %v398
      %v400 = vpop.f32.mrb[0].mxu0
      %401 = vmatprep.mubr.bf16.mxu0 0
      %402 = vmatmul.mubr.bf16.gmra.mrb[0].mxu0 %v336
      %v403 = vpop.f32.mrb[0].mxu0
      %v404 = vadd.f32 %v315, %v403
      %v405 = vpop.f32.mrb[0].mxu0
      %v406 = vpop.f32.mrb[0].mxu0
      %v407 = vadd.f32 %v315, %v406
      %v408 = vpop.f32.mrb[0].mxu0
      %409 = vmatprep.mubr.bf16.mxu0 0
      %410 = vmatmul.mubr.bf16.gmra.mrb[0].mxu0 %v339
      %v411 = vpop.f32.mrb[0].mxu0
      %v412 = vadd.f32 %v315, %v411
      %v413 = vpop.f32.mrb[0].mxu0
      %v414 = vpop.f32.mrb[0].mxu0
      %v415 = vadd.f32 %v315, %v414
      %v416 = vpop.f32.mrb[0].mxu0
      %417 = vmatprep.mubr.bf16.mxu0 0
      %418 = vmatmul.mubr.bf16.gmra.mrb[0].mxu0 %v342
      %v419 = vpop.f32.mrb[0].mxu0
      %v420 = vadd.f32 %v315, %v419
      %v421 = vpop.f32.mrb[0].mxu0
      %v422 = vpop.f32.mrb[0].mxu0
      %v423 = vadd.f32 %v315, %v422
      %v424 = vpop.f32.mrb[0].mxu0
      %425 = vmatprep.mubr.bf16.mxu0 0
      %426 = vmatmul.mubr.bf16.gmra.mrb[0].mxu0 %v345
      %v427 = vpop.f32.mrb[0].mxu0
      %v428 = vadd.f32 %v315, %v427
      %v429 = vpop.f32.mrb[0].mxu0
      %v430 = vpop.f32.mrb[0].mxu0
      %v431 = vadd.f32 %v315, %v430
      %v432 = vpop.f32.mrb[0].mxu0
      %433 = vmatprep.mubr.bf16.mxu0 0
      %434 = vmatmul.mubr.bf16.gmra.mrb[0].mxu0 %v348
      %v435 = vpop.f32.mrb[0].mxu0
      %v436 = vadd.f32 %v315, %v435
      %v437 = vpop.f32.mrb[0].mxu0
      %v438 = vpop.f32.mrb[0].mxu0
      %v439 = vadd.f32 %v315, %v438
      %v440 = vpop.f32.mrb[0].mxu0
      %441 = vmatprep.mubr.bf16.mxu0 0
      %442 = vmatmul.mubr.bf16.gmra.mrb[0].mxu0 %v351
      %v443 = vpop.f32.mrb[0].mxu0
      %v444 = vadd.f32 %v315, %v443
      %v445 = vpop.f32.mrb[0].mxu0
      %v446 = vpop.f32.mrb[0].mxu0
      %v447 = vadd.f32 %v315, %v446
      %v448 = vpop.f32.mrb[0].mxu0
      %449 = vdwg.mxu0
      %vm450 = vcmp.gt.f32.partialorder %v388, 0.0
      %vm451 = vcmp.gt.f32.partialorder %v391, 0.0
      %vm452 = vcmp.gt.f32.partialorder %v396, 0.0
      %vm453 = vcmp.gt.f32.partialorder %v399, 0.0
      %vm454 = vcmp.gt.f32.partialorder %v404, 0.0
      %vm455 = vcmp.gt.f32.partialorder %v407, 0.0
      %vm456 = vcmp.gt.f32.partialorder %v412, 0.0
      %vm457 = vcmp.gt.f32.partialorder %v415, 0.0
      %vm458 = vcmp.gt.f32.partialorder %v420, 0.0
      %vm459 = vcmp.gt.f32.partialorder %v423, 0.0
      %vm460 = vcmp.gt.f32.partialorder %v428, 0.0
      %vm461 = vcmp.gt.f32.partialorder %v431, 0.0
      %vm462 = vcmp.gt.f32.partialorder %v436, 0.0
      %vm463 = vcmp.gt.f32.partialorder %v439, 0.0
      %vm464 = vcmp.gt.f32.partialorder %v444, 0.0
      %vm465 = vcmp.gt.f32.partialorder %v447, 0.0
      %v466 = vmin.f32 %v388, 0.0
      %v467 = vmin.f32 %v391, 0.0
      %v468 = vmin.f32 %v396, 0.0
      %v469 = vmin.f32 %v399, 0.0
      %v470 = vmin.f32 %v404, 0.0
      %v471 = vmin.f32 %v407, 0.0
      %v472 = vmin.f32 %v412, 0.0
      %v473 = vmin.f32 %v415, 0.0
      %v474 = vmin.f32 %v420, 0.0
      %v475 = vmin.f32 %v423, 0.0
      %v476 = vmin.f32 %v428, 0.0
      %v477 = vmin.f32 %v431, 0.0
      %v478 = vmin.f32 %v436, 0.0
      %v479 = vmin.f32 %v439, 0.0
      %v480 = vmin.f32 %v444, 0.0
      %v481 = vmin.f32 %v447, 0.0
      %v482 = vmul.f32 %v466, 1.442695
      %v483 = vpow.pop %v482
      %v484 = vmul.f32 %v467, 1.442695
      %v485 = vpow.pop %v484
      %v486 = vmul.f32 %v468, 1.442695
      %v487 = vpow.pop %v486
      %v488 = vmul.f32 %v469, 1.442695
      %v489 = vpow.pop %v488
      %v490 = vmul.f32 %v470, 1.442695
      %v491 = vpow.pop %v490
      %v492 = vmul.f32 %v471, 1.442695
      %v493 = vpow.pop %v492
      %v494 = vmul.f32 %v472, 1.442695
      %v495 = vpow.pop %v494
      %v496 = vmul.f32 %v473, 1.442695
      %v497 = vpow.pop %v496
      %v498 = vmul.f32 %v474, 1.442695
      %v499 = vpow.pop %v498
      %v500 = vmul.f32 %v475, 1.442695
      %v501 = vpow.pop %v500
      %v502 = vmul.f32 %v476, 1.442695
      %v503 = vpow.pop %v502
      %v504 = vmul.f32 %v477, 1.442695
      %v505 = vpow.pop %v504
      %v506 = vmul.f32 %v478, 1.442695
      %v507 = vpow.pop %v506
      %v508 = vmul.f32 %v479, 1.442695
      %v509 = vpow.pop %v508
      %v510 = vmul.f32 %v480, 1.442695
      %v511 = vpow.pop %v510
      %v512 = vmul.f32 %v481, 1.442695
      %v513 = vpow.pop %v512
      %v514 = vsub.f32 %v483, 1.0
      %v515 = vsub.f32 %v485, 1.0
      %v516 = vsub.f32 %v487, 1.0
      %v517 = vsub.f32 %v489, 1.0
      %v518 = vsub.f32 %v491, 1.0
      %v519 = vsub.f32 %v493, 1.0
      %v520 = vsub.f32 %v495, 1.0
      %v521 = vsub.f32 %v497, 1.0
      %v522 = vsub.f32 %v499, 1.0
      %v523 = vsub.f32 %v501, 1.0
      %v524 = vsub.f32 %v503, 1.0
      %v525 = vsub.f32 %v505, 1.0
      %v526 = vsub.f32 %v507, 1.0
      %v527 = vsub.f32 %v509, 1.0
      %v528 = vsub.f32 %v511, 1.0
      %v529 = vsub.f32 %v513, 1.0
      %v530 = vsel %vm450, %v388, %v514
      %v531 = vsel %vm451, %v391, %v515
      %v532 = vsel %vm452, %v396, %v516
      %v533 = vsel %vm453, %v399, %v517
      %v534 = vsel %vm454, %v404, %v518
      %v535 = vsel %vm455, %v407, %v519
      %v536 = vsel %vm456, %v412, %v520
      %v537 = vsel %vm457, %v415, %v521
      %v538 = vsel %vm458, %v420, %v522
      %v539 = vsel %vm459, %v423, %v523
      %v540 = vsel %vm460, %v428, %v524
      %v541 = vsel %vm461, %v431, %v525
      %v542 = vsel %vm462, %v436, %v526
      %v543 = vsel %vm463, %v439, %v527
      %v544 = vsel %vm464, %v444, %v528
      %v545 = vsel %vm465, %v447, %v529
      %v546 = vpack.c.bf16 %v531, %v530
      %v547 = vpack.c.bf16 %v533, %v532
      %v548 = vpack.c.bf16 %v535, %v534
      %v549 = vpack.c.bf16 %v537, %v536
      %v550 = vpack.c.bf16 %v539, %v538
      %v551 = vpack.c.bf16 %v541, %v540
      %v552 = vpack.c.bf16 %v543, %v542
      %v553 = vpack.c.bf16 %v545, %v544
      %v554 = vld [vmem:[%s3] sm:$0xf]
      %v555 = vld [vmem:[%s3 + $0x4] sm:$0xf]
      %v556 = vld [vmem:[%s3 + $0x8] sm:$0xf]
      %v557 = vld [vmem:[%s3 + $0xc] sm:$0xf]
      %v558 = vlaneseq
      %v559 = vshrl.u32 %v558, 7
      %v560 = vsub.s32 0, %v559
      %v561 = vrot.slane %v279, %v560
      %v566 = vunpack.c.l.b16 %v554
      %v567 = vunpack.c.l.b16 %v555
      %v568 = vunpack.c.l.b16 %v556
      %v569 = vunpack.c.l.b16 %v557
      %v570 = vpack.c.b16 %v567, %v566
      %v571 = vpack.c.b16 %v569, %v568
      %v575 = vsel %vm328, %v546, 0
      %v578 = vsel %vm328, %v547, 0
      %v581 = vsel %vm328, %v548, 0
      %v584 = vsel %vm328, %v549, 0
      %v587 = vsel %vm328, %v550, 0
      %v590 = vsel %vm328, %v551, 0
      %v593 = vsel %vm328, %v552, 0
      %v596 = vsel %vm328, %v553, 0
      %598 = vmatprep.subr.bf16.mxu0 0
      %599 = vmatpush1.bf16.msra.mxu0 %v570
      %600 = vmatprep.subr.bf16.mxu0 0
      %601 = vmatpush1.bf16.msra.mxu0 %v571
      %602 = vmatprep.subr.bf16.mxu0 0
      %603 = vmatpush1.bf16.msra.mxu0 0
      %604 = vmatprep.subr.bf16.mxu0 0
      %605 = vmatpush1.bf16.msra.mxu0 0
      %606 = vmatprep.subr.bf16.mxu0 0
      %607 = vmatpush1.bf16.msra.mxu0 0
      %608 = vmatprep.subr.bf16.mxu0 0
      %609 = vmatpush1.bf16.msra.mxu0 0
      %610 = vmatprep.subr.bf16.mxu0 0
      %611 = vmatpush1.bf16.msra.mxu0 0
      %612 = vmatprep.subr.bf16.mxu0 0
      %613 = vmatpush1.bf16.msra.mxu0 0
      %614 = vmatprep.subr.bf16.mxu0 0
      %615 = vmatpush1.bf16.msra.mxu0 0
      %616 = vmatprep.subr.bf16.mxu0 0
      %617 = vmatpush1.bf16.msra.mxu0 0
      %618 = vmatprep.subr.bf16.mxu0 0
      %619 = vmatpush1.bf16.msra.mxu0 0
      %620 = vmatprep.subr.bf16.mxu0 0
      %621 = vmatpush1.bf16.msra.mxu0 0
      %622 = vmatprep.subr.bf16.mxu0 0
      %623 = vmatpush1.bf16.msra.mxu0 0
      %624 = vmatprep.subr.bf16.mxu0 0
      %625 = vmatpush1.bf16.msra.mxu0 0
      %626 = vmatprep.subr.bf16.mxu0 0
      %627 = vmatpush1.bf16.msra.mxu0 0
      %628 = vmatprep.subr.bf16.mxu0 0
      %629 = vmatpush1.bf16.msra.mxu0 0
      %630 = vmatprep.mubr.bf16.mxu0 0
      %631 = vmatmul.mubr.bf16.gmra.mrb[0].mxu0 %v575
      %v632 = vpop.f32.mrb[0].mxu0
      %v633 = vadd.f32 %v561, %v632
      %v634 = vpop.f32.mrb[0].mxu0
      %v635 = vpop.f32.mrb[0].mxu0
      %v636 = vadd.f32 %v561, %v635
      %v637 = vpop.f32.mrb[0].mxu0
      %638 = vmatprep.mubr.bf16.mxu0 0
      %639 = vmatmul.mubr.bf16.gmra.mrb[0].mxu0 %v578
      %v640 = vpop.f32.mrb[0].mxu0
      %v641 = vadd.f32 %v561, %v640
      %v642 = vpop.f32.mrb[0].mxu0
      %v643 = vpop.f32.mrb[0].mxu0
      %v644 = vadd.f32 %v561, %v643
      %v645 = vpop.f32.mrb[0].mxu0
      %646 = vmatprep.mubr.bf16.mxu0 0
      %647 = vmatmul.mubr.bf16.gmra.mrb[0].mxu0 %v581
      %v648 = vpop.f32.mrb[0].mxu0
      %v649 = vadd.f32 %v561, %v648
      %v650 = vpop.f32.mrb[0].mxu0
      %v651 = vpop.f32.mrb[0].mxu0
      %v652 = vadd.f32 %v561, %v651
      %v653 = vpop.f32.mrb[0].mxu0
      %654 = vmatprep.mubr.bf16.mxu0 0
      %655 = vmatmul.mubr.bf16.gmra.mrb[0].mxu0 %v584
      %v656 = vpop.f32.mrb[0].mxu0
      %v657 = vadd.f32 %v561, %v656
      %v658 = vpop.f32.mrb[0].mxu0
      %v659 = vpop.f32.mrb[0].mxu0
      %v660 = vadd.f32 %v561, %v659
      %v661 = vpop.f32.mrb[0].mxu0
      %662 = vmatprep.mubr.bf16.mxu0 0
      %663 = vmatmul.mubr.bf16.gmra.mrb[0].mxu0 %v587
      %v664 = vpop.f32.mrb[0].mxu0
      %v665 = vadd.f32 %v561, %v664
      %v666 = vpop.f32.mrb[0].mxu0
      %v667 = vpop.f32.mrb[0].mxu0
      %v668 = vadd.f32 %v561, %v667
      %v669 = vpop.f32.mrb[0].mxu0
      %670 = vmatprep.mubr.bf16.mxu0 0
      %671 = vmatmul.mubr.bf16.gmra.mrb[0].mxu0 %v590
      %v672 = vpop.f32.mrb[0].mxu0
      %v673 = vadd.f32 %v561, %v672
      %v674 = vpop.f32.mrb[0].mxu0
      %v675 = vpop.f32.mrb[0].mxu0
      %v676 = vadd.f32 %v561, %v675
      %v677 = vpop.f32.mrb[0].mxu0
      %678 = vmatprep.mubr.bf16.mxu0 0
      %679 = vmatmul.mubr.bf16.gmra.mrb[0].mxu0 %v593
      %v680 = vpop.f32.mrb[0].mxu0
      %v681 = vadd.f32 %v561, %v680
      %v682 = vpop.f32.mrb[0].mxu0
      %v683 = vpop.f32.mrb[0].mxu0
      %v684 = vadd.f32 %v561, %v683
      %v685 = vpop.f32.mrb[0].mxu0
      %686 = vmatprep.mubr.bf16.mxu0 0
      %687 = vmatmul.mubr.bf16.gmra.mrb[0].mxu0 %v596
      %v688 = vpop.f32.mrb[0].mxu0
      %v689 = vadd.f32 %v561, %v688
      %v690 = vpop.f32.mrb[0].mxu0
      %v691 = vpop.f32.mrb[0].mxu0
      %v692 = vadd.f32 %v561, %v691
      %v693 = vpop.f32.mrb[0].mxu0
      %694 = vdwg.mxu0
      %vm695 = vcmp.gt.f32.partialorder %v633, 0.0
      %vm696 = vcmp.gt.f32.partialorder %v636, 0.0
      %vm697 = vcmp.gt.f32.partialorder %v641, 0.0
      %vm698 = vcmp.gt.f32.partialorder %v644, 0.0
      %vm699 = vcmp.gt.f32.partialorder %v649, 0.0
      %vm700 = vcmp.gt.f32.partialorder %v652, 0.0
      %vm701 = vcmp.gt.f32.partialorder %v657, 0.0
      %vm702 = vcmp.gt.f32.partialorder %v660, 0.0
      %vm703 = vcmp.gt.f32.partialorder %v665, 0.0
      %vm704 = vcmp.gt.f32.partialorder %v668, 0.0
      %vm705 = vcmp.gt.f32.partialorder %v673, 0.0
      %vm706 = vcmp.gt.f32.partialorder %v676, 0.0
      %vm707 = vcmp.gt.f32.partialorder %v681, 0.0
      %vm708 = vcmp.gt.f32.partialorder %v684, 0.0
      %vm709 = vcmp.gt.f32.partialorder %v689, 0.0
      %vm710 = vcmp.gt.f32.partialorder %v692, 0.0
      %v711 = vmin.f32 %v633, 0.0
      %v712 = vmin.f32 %v636, 0.0
      %v713 = vmin.f32 %v641, 0.0
      %v714 = vmin.f32 %v644, 0.0
      %v715 = vmin.f32 %v649, 0.0
      %v716 = vmin.f32 %v652, 0.0
      %v717 = vmin.f32 %v657, 0.0
      %v718 = vmin.f32 %v660, 0.0
      %v719 = vmin.f32 %v665, 0.0
      %v720 = vmin.f32 %v668, 0.0
      %v721 = vmin.f32 %v673, 0.0
      %v722 = vmin.f32 %v676, 0.0
      %v723 = vmin.f32 %v681, 0.0
      %v724 = vmin.f32 %v684, 0.0
      %v725 = vmin.f32 %v689, 0.0
      %v726 = vmin.f32 %v692, 0.0
      %v727 = vmul.f32 %v711, 1.442695
      %v728 = vpow.pop %v727
      %v729 = vmul.f32 %v712, 1.442695
      %v730 = vpow.pop %v729
      %v731 = vmul.f32 %v713, 1.442695
      %v732 = vpow.pop %v731
      %v733 = vmul.f32 %v714, 1.442695
      %v734 = vpow.pop %v733
      %v735 = vmul.f32 %v715, 1.442695
      %v736 = vpow.pop %v735
      %v737 = vmul.f32 %v716, 1.442695
      %v738 = vpow.pop %v737
      %v739 = vmul.f32 %v717, 1.442695
      %v740 = vpow.pop %v739
      %v741 = vmul.f32 %v718, 1.442695
      %v742 = vpow.pop %v741
      %v743 = vmul.f32 %v719, 1.442695
      %v744 = vpow.pop %v743
      %v745 = vmul.f32 %v720, 1.442695
      %v746 = vpow.pop %v745
      %v747 = vmul.f32 %v721, 1.442695
      %v748 = vpow.pop %v747
      %v749 = vmul.f32 %v722, 1.442695
      %v750 = vpow.pop %v749
      %v751 = vmul.f32 %v723, 1.442695
      %v752 = vpow.pop %v751
      %v753 = vmul.f32 %v724, 1.442695
      %v754 = vpow.pop %v753
      %v755 = vmul.f32 %v725, 1.442695
      %v756 = vpow.pop %v755
      %v757 = vmul.f32 %v726, 1.442695
      %v758 = vpow.pop %v757
      %v759 = vsub.f32 %v728, 1.0
      %v760 = vsub.f32 %v730, 1.0
      %v761 = vsub.f32 %v732, 1.0
      %v762 = vsub.f32 %v734, 1.0
      %v763 = vsub.f32 %v736, 1.0
      %v764 = vsub.f32 %v738, 1.0
      %v765 = vsub.f32 %v740, 1.0
      %v766 = vsub.f32 %v742, 1.0
      %v767 = vsub.f32 %v744, 1.0
      %v768 = vsub.f32 %v746, 1.0
      %v769 = vsub.f32 %v748, 1.0
      %v770 = vsub.f32 %v750, 1.0
      %v771 = vsub.f32 %v752, 1.0
      %v772 = vsub.f32 %v754, 1.0
      %v773 = vsub.f32 %v756, 1.0
      %v774 = vsub.f32 %v758, 1.0
      %v775 = vsel %vm695, %v633, %v759
      %v776 = vsel %vm696, %v636, %v760
      %v777 = vsel %vm697, %v641, %v761
      %v778 = vsel %vm698, %v644, %v762
      %v779 = vsel %vm699, %v649, %v763
      %v780 = vsel %vm700, %v652, %v764
      %v781 = vsel %vm701, %v657, %v765
      %v782 = vsel %vm702, %v660, %v766
      %v783 = vsel %vm703, %v665, %v767
      %v784 = vsel %vm704, %v668, %v768
      %v785 = vsel %vm705, %v673, %v769
      %v786 = vsel %vm706, %v676, %v770
      %v787 = vsel %vm707, %v681, %v771
      %v788 = vsel %vm708, %v684, %v772
      %v789 = vsel %vm709, %v689, %v773
      %v790 = vsel %vm710, %v692, %v774
      %v791 = vpack.c.bf16 %v776, %v775
      %v792 = vpack.c.bf16 %v778, %v777
      %v793 = vpack.c.bf16 %v780, %v779
      %v794 = vpack.c.bf16 %v782, %v781
      %v795 = vpack.c.bf16 %v784, %v783
      %v796 = vpack.c.bf16 %v786, %v785
      %v797 = vpack.c.bf16 %v788, %v787
      %v798 = vpack.c.bf16 %v790, %v789
      %v799 = vld [vmem:[%s4] sm:$0xf]
      %v800 = vld [vmem:[%s4 + $0x4] sm:$0xf]
      %v801 = vld [vmem:[%s4 + $0x8] sm:$0xf]
      %v802 = vld [vmem:[%s4 + $0xc] sm:$0xf]
      %v803 = vlaneseq
      %v804 = vshrl.u32 %v803, 7
      %v805 = vsub.s32 0, %v804
      %v806 = vrot.slane %v280, %v805
      %v811 = vunpack.c.l.b16 %v799
      %v812 = vunpack.c.l.b16 %v800
      %v813 = vunpack.c.l.b16 %v801
      %v814 = vunpack.c.l.b16 %v802
      %v815 = vpack.c.b16 %v812, %v811
      %v816 = vpack.c.b16 %v814, %v813
      %v820 = vsel %vm328, %v791, 0
      %v823 = vsel %vm328, %v792, 0
      %v826 = vsel %vm328, %v793, 0
      %v829 = vsel %vm328, %v794, 0
      %v832 = vsel %vm328, %v795, 0
      %v835 = vsel %vm328, %v796, 0
      %v838 = vsel %vm328, %v797, 0
      %v841 = vsel %vm328, %v798, 0
      %843 = vmatprep.subr.bf16.mxu0 0
      %844 = vmatpush1.bf16.msra.mxu0 %v815
      %845 = vmatprep.subr.bf16.mxu0 0
      %846 = vmatpush1.bf16.msra.mxu0 %v816
      %847 = vmatprep.subr.bf16.mxu0 0
      %848 = vmatpush1.bf16.msra.mxu0 0
      %849 = vmatprep.subr.bf16.mxu0 0
      %850 = vmatpush1.bf16.msra.mxu0 0
      %851 = vmatprep.subr.bf16.mxu0 0
      %852 = vmatpush1.bf16.msra.mxu0 0
      %853 = vmatprep.subr.bf16.mxu0 0
      %854 = vmatpush1.bf16.msra.mxu0 0
      %855 = vmatprep.subr.bf16.mxu0 0
      %856 = vmatpush1.bf16.msra.mxu0 0
      %857 = vmatprep.subr.bf16.mxu0 0
      %858 = vmatpush1.bf16.msra.mxu0 0
      %859 = vmatprep.subr.bf16.mxu0 0
      %860 = vmatpush1.bf16.msra.mxu0 0
      %861 = vmatprep.subr.bf16.mxu0 0
      %862 = vmatpush1.bf16.msra.mxu0 0
      %863 = vmatprep.subr.bf16.mxu0 0
      %864 = vmatpush1.bf16.msra.mxu0 0
      %865 = vmatprep.subr.bf16.mxu0 0
      %866 = vmatpush1.bf16.msra.mxu0 0
      %867 = vmatprep.subr.bf16.mxu0 0
      %868 = vmatpush1.bf16.msra.mxu0 0
      %869 = vmatprep.subr.bf16.mxu0 0
      %870 = vmatpush1.bf16.msra.mxu0 0
      %871 = vmatprep.subr.bf16.mxu0 0
      %872 = vmatpush1.bf16.msra.mxu0 0
      %873 = vmatprep.subr.bf16.mxu0 0
      %874 = vmatpush1.bf16.msra.mxu0 0
      %875 = vmatprep.mubr.bf16.mxu0 0
      %876 = vmatmul.mubr.bf16.gmra.mrb[0].mxu0 %v820
      %v877 = vpop.f32.mrb[0].mxu0
      %v878 = vadd.f32 %v806, %v877
      %v879 = vpop.f32.mrb[0].mxu0
      %v880 = vpop.f32.mrb[0].mxu0
      %v881 = vadd.f32 %v806, %v880
      %v882 = vpop.f32.mrb[0].mxu0
      %883 = vmatprep.mubr.bf16.mxu0 0
      %884 = vmatmul.mubr.bf16.gmra.mrb[0].mxu0 %v823
      %v885 = vpop.f32.mrb[0].mxu0
      %v886 = vadd.f32 %v806, %v885
      %v887 = vpop.f32.mrb[0].mxu0
      %v888 = vpop.f32.mrb[0].mxu0
      %v889 = vadd.f32 %v806, %v888
      %v890 = vpop.f32.mrb[0].mxu0
      %891 = vmatprep.mubr.bf16.mxu0 0
      %892 = vmatmul.mubr.bf16.gmra.mrb[0].mxu0 %v826
      %v893 = vpop.f32.mrb[0].mxu0
      %v894 = vadd.f32 %v806, %v893
      %v895 = vpop.f32.mrb[0].mxu0
      %v896 = vpop.f32.mrb[0].mxu0
      %v897 = vadd.f32 %v806, %v896
      %v898 = vpop.f32.mrb[0].mxu0
      %899 = vmatprep.mubr.bf16.mxu0 0
      %900 = vmatmul.mubr.bf16.gmra.mrb[0].mxu0 %v829
      %v901 = vpop.f32.mrb[0].mxu0
      %v902 = vadd.f32 %v806, %v901
      %v903 = vpop.f32.mrb[0].mxu0
      %v904 = vpop.f32.mrb[0].mxu0
      %v905 = vadd.f32 %v806, %v904
      %v906 = vpop.f32.mrb[0].mxu0
      %907 = vmatprep.mubr.bf16.mxu0 0
      %908 = vmatmul.mubr.bf16.gmra.mrb[0].mxu0 %v832
      %v909 = vpop.f32.mrb[0].mxu0
      %v910 = vadd.f32 %v806, %v909
      %v911 = vpop.f32.mrb[0].mxu0
      %v912 = vpop.f32.mrb[0].mxu0
      %v913 = vadd.f32 %v806, %v912
      %v914 = vpop.f32.mrb[0].mxu0
      %915 = vmatprep.mubr.bf16.mxu0 0
      %916 = vmatmul.mubr.bf16.gmra.mrb[0].mxu0 %v835
      %v917 = vpop.f32.mrb[0].mxu0
      %v918 = vadd.f32 %v806, %v917
      %v919 = vpop.f32.mrb[0].mxu0
      %v920 = vpop.f32.mrb[0].mxu0
      %v921 = vadd.f32 %v806, %v920
      %v922 = vpop.f32.mrb[0].mxu0
      %923 = vmatprep.mubr.bf16.mxu0 0
      %924 = vmatmul.mubr.bf16.gmra.mrb[0].mxu0 %v838
      %v925 = vpop.f32.mrb[0].mxu0
      %v926 = vadd.f32 %v806, %v925
      %v927 = vpop.f32.mrb[0].mxu0
      %v928 = vpop.f32.mrb[0].mxu0
      %v929 = vadd.f32 %v806, %v928
      %v930 = vpop.f32.mrb[0].mxu0
      %931 = vmatprep.mubr.bf16.mxu0 0
      %932 = vmatmul.mubr.bf16.gmra.mrb[0].mxu0 %v841
      %v933 = vpop.f32.mrb[0].mxu0
      %v934 = vadd.f32 %v806, %v933
      %v935 = vpop.f32.mrb[0].mxu0
      %v936 = vpop.f32.mrb[0].mxu0
      %v937 = vadd.f32 %v806, %v936
      %v938 = vpop.f32.mrb[0].mxu0
      %939 = vdwg.mxu0
      %v940 = vtanh.pop %v878
      %v941 = vtanh.pop %v881
      %v942 = vtanh.pop %v886
      %v943 = vtanh.pop %v889
      %v944 = vtanh.pop %v894
      %v945 = vtanh.pop %v897
      %v946 = vtanh.pop %v902
      %v947 = vtanh.pop %v905
      %v948 = vtanh.pop %v910
      %v949 = vtanh.pop %v913
      %v950 = vtanh.pop %v918
      %v951 = vtanh.pop %v921
      %v952 = vtanh.pop %v926
      %v953 = vtanh.pop %v929
      %v954 = vtanh.pop %v934
      %v955 = vtanh.pop %v937
      %v956 = vld [vmem:[%s269] sm:$0xff]
      %v957 = vld [vmem:[%s269 + $0x8] sm:$0xff]
      %v958 = vld [vmem:[%s269 + $0x10] sm:$0xff]
      %v959 = vld [vmem:[%s269 + $0x18] sm:$0xff]
      %v960 = vld [vmem:[%s269 + $0x20] sm:$0xff]
      %v961 = vld [vmem:[%s269 + $0x28] sm:$0xff]
      %v962 = vld [vmem:[%s269 + $0x30] sm:$0xff]
      %v963 = vld [vmem:[%s269 + $0x38] sm:$0xff]
      %v964 = vld [vmem:[%s269 + $0x40] sm:$0xff]
      %v965 = vld [vmem:[%s269 + $0x48] sm:$0xff]
      %v966 = vld [vmem:[%s269 + $0x50] sm:$0xff]
      %v967 = vld [vmem:[%s269 + $0x58] sm:$0xff]
      %v968 = vld [vmem:[%s269 + $0x60] sm:$0xff]
      %v969 = vld [vmem:[%s269 + $0x68] sm:$0xff]
      %v970 = vld [vmem:[%s269 + $0x70] sm:$0xff]
      %v971 = vld [vmem:[%s269 + $0x78] sm:$0xff]
      %v972 = vlaneseq
      %v973 = vshrl.u32 %v972, 7
      %v974 = vsub.s32 0, %v973
      %v975 = vrot.slane %v281, %v974
      %v976 = vmul.f32 %v975, %v956
      %v977 = vmul.f32 %v975, %v957
      %v978 = vmul.f32 %v975, %v958
      %v979 = vmul.f32 %v975, %v959
      %v980 = vmul.f32 %v975, %v960
      %v981 = vmul.f32 %v975, %v961
      %v982 = vmul.f32 %v975, %v962
      %v983 = vmul.f32 %v975, %v963
      %v984 = vmul.f32 %v975, %v964
      %v985 = vmul.f32 %v975, %v965
      %v986 = vmul.f32 %v975, %v966
      %v987 = vmul.f32 %v975, %v967
      %v988 = vmul.f32 %v975, %v968
      %v989 = vmul.f32 %v975, %v969
      %v990 = vmul.f32 %v975, %v970
      %v991 = vmul.f32 %v975, %v971
      %v992 = vadd.f32 %v940, %v976
      %v993 = vadd.f32 %v941, %v977
      %v994 = vadd.f32 %v942, %v978
      %v995 = vadd.f32 %v943, %v979
      %v996 = vadd.f32 %v944, %v980
      %v997 = vadd.f32 %v945, %v981
      %v998 = vadd.f32 %v946, %v982
      %v999 = vadd.f32 %v947, %v983
      %v1000 = vadd.f32 %v948, %v984
      %v1001 = vadd.f32 %v949, %v985
      %v1002 = vadd.f32 %v950, %v986
      %v1003 = vadd.f32 %v951, %v987
      %v1004 = vadd.f32 %v952, %v988
      %v1005 = vadd.f32 %v953, %v989
      %v1006 = vadd.f32 %v954, %v990
      %v1007 = vadd.f32 %v955, %v991
      %v1008 = vmax.f32 %v992, -1.0
      %v1009 = vmax.f32 %v993, -1.0
      %v1010 = vmax.f32 %v994, -1.0
      %v1011 = vmax.f32 %v995, -1.0
      %v1012 = vmax.f32 %v996, -1.0
      %v1013 = vmax.f32 %v997, -1.0
      %v1014 = vmax.f32 %v998, -1.0
      %v1015 = vmax.f32 %v999, -1.0
      %v1016 = vmax.f32 %v1000, -1.0
      %v1017 = vmax.f32 %v1001, -1.0
      %v1018 = vmax.f32 %v1002, -1.0
      %v1019 = vmax.f32 %v1003, -1.0
      %v1020 = vmax.f32 %v1004, -1.0
      %v1021 = vmax.f32 %v1005, -1.0
      %v1022 = vmax.f32 %v1006, -1.0
      %v1023 = vmax.f32 %v1007, -1.0
      %v1024 = vmin.f32 %v1008, 1.0
      %v1025 = vmin.f32 %v1009, 1.0
      %v1026 = vmin.f32 %v1010, 1.0
      %v1027 = vmin.f32 %v1011, 1.0
      %v1028 = vmin.f32 %v1012, 1.0
      %v1029 = vmin.f32 %v1013, 1.0
      %v1030 = vmin.f32 %v1014, 1.0
      %v1031 = vmin.f32 %v1015, 1.0
      %v1032 = vmin.f32 %v1016, 1.0
      %v1033 = vmin.f32 %v1017, 1.0
      %v1034 = vmin.f32 %v1018, 1.0
      %v1035 = vmin.f32 %v1019, 1.0
      %v1036 = vmin.f32 %v1020, 1.0
      %v1037 = vmin.f32 %v1021, 1.0
      %v1038 = vmin.f32 %v1022, 1.0
      %v1039 = vmin.f32 %v1023, 1.0
      %v1040 = vsub.f32 %v1024, %v940
      %v1041 = vsub.f32 %v1025, %v941
      %v1042 = vsub.f32 %v1026, %v942
      %v1043 = vsub.f32 %v1027, %v943
      %v1044 = vsub.f32 %v1028, %v944
      %v1045 = vsub.f32 %v1029, %v945
      %v1046 = vsub.f32 %v1030, %v946
      %v1047 = vsub.f32 %v1031, %v947
      %v1048 = vsub.f32 %v1032, %v948
      %v1049 = vsub.f32 %v1033, %v949
      %v1050 = vsub.f32 %v1034, %v950
      %v1051 = vsub.f32 %v1035, %v951
      %v1052 = vsub.f32 %v1036, %v952
      %v1053 = vsub.f32 %v1037, %v953
      %v1054 = vsub.f32 %v1038, %v954
      %v1055 = vsub.f32 %v1039, %v955
      %v1056 = vmul.f32 %v1040, %v1040
      %v1057 = vmul.f32 %v1041, %v1041
      %v1058 = vmul.f32 %v1042, %v1042
      %v1059 = vmul.f32 %v1043, %v1043
      %v1060 = vmul.f32 %v1044, %v1044
      %v1061 = vmul.f32 %v1045, %v1045
      %v1062 = vmul.f32 %v1046, %v1046
      %v1063 = vmul.f32 %v1047, %v1047
      %v1064 = vmul.f32 %v1048, %v1048
      %v1065 = vmul.f32 %v1049, %v1049
      %v1066 = vmul.f32 %v1050, %v1050
      %v1067 = vmul.f32 %v1051, %v1051
      %v1068 = vmul.f32 %v1052, %v1052
      %v1069 = vmul.f32 %v1053, %v1053
      %v1070 = vmul.f32 %v1054, %v1054
      %v1071 = vmul.f32 %v1055, %v1055
      %v1072 = vlaneseq
      %v1073 = vshrl.u32 %v1072, 7
      %v1074 = vsub.s32 0, %v1073
      %v1075 = vrot.slane %v282, %v1074
      %v1076 = vmul.f32 %v1056, %v1075
      %v1077 = vmul.f32 %v1057, %v1075
      %v1078 = vmul.f32 %v1058, %v1075
      %v1079 = vmul.f32 %v1059, %v1075
      %v1080 = vmul.f32 %v1060, %v1075
      %v1081 = vmul.f32 %v1061, %v1075
      %v1082 = vmul.f32 %v1062, %v1075
      %v1083 = vmul.f32 %v1063, %v1075
      %v1084 = vmul.f32 %v1064, %v1075
      %v1085 = vmul.f32 %v1065, %v1075
      %v1086 = vmul.f32 %v1066, %v1075
      %v1087 = vmul.f32 %v1067, %v1075
      %v1088 = vmul.f32 %v1068, %v1075
      %v1089 = vmul.f32 %v1069, %v1075
      %v1090 = vmul.f32 %v1070, %v1075
      %v1091 = vmul.f32 %v1071, %v1075
      %v1092 = vlaneseq
      %v1093 = vshrl.u32 %v1092, 7
      %v1094 = vsub.s32 0, %v1093
      %v1095 = vrot.slane %v283, %v1094
      %v1096 = vsub.f32 %v1076, %v1095
      %v1097 = vsub.f32 %v1077, %v1095
      %v1098 = vsub.f32 %v1078, %v1095
      %v1099 = vsub.f32 %v1079, %v1095
      %v1100 = vsub.f32 %v1080, %v1095
      %v1101 = vsub.f32 %v1081, %v1095
      %v1102 = vsub.f32 %v1082, %v1095
      %v1103 = vsub.f32 %v1083, %v1095
      %v1104 = vsub.f32 %v1084, %v1095
      %v1105 = vsub.f32 %v1085, %v1095
      %v1106 = vsub.f32 %v1086, %v1095
      %v1107 = vsub.f32 %v1087, %v1095
      %v1108 = vsub.f32 %v1088, %v1095
      %v1109 = vsub.f32 %v1089, %v1095
      %v1110 = vsub.f32 %v1090, %v1095
      %v1111 = vsub.f32 %v1091, %v1095
      %v1112 = vlaneseq
      %v1113 = vand.u32 %v1112, 127
      %vm1114 = vcmp.lt.s32.totalorder %v1113, 8
      %v1115 = vsel %vm1114, %v1096, 0.0
      %v1116 = vsel %vm1114, %v1097, 0.0
      %v1117 = vsel %vm1114, %v1098, 0.0
      %v1118 = vsel %vm1114, %v1099, 0.0
      %v1119 = vsel %vm1114, %v1100, 0.0
      %v1120 = vsel %vm1114, %v1101, 0.0
      %v1121 = vsel %vm1114, %v1102, 0.0
      %v1122 = vsel %vm1114, %v1103, 0.0
      %v1123 = vsel %vm1114, %v1104, 0.0
      %v1124 = vsel %vm1114, %v1105, 0.0
      %v1125 = vsel %vm1114, %v1106, 0.0
      %v1126 = vsel %vm1114, %v1107, 0.0
      %v1127 = vsel %vm1114, %v1108, 0.0
      %v1128 = vsel %vm1114, %v1109, 0.0
      %v1129 = vsel %vm1114, %v1110, 0.0
      %v1130 = vsel %vm1114, %v1111, 0.0
      %vm1131 = vcmask 130048
      %v1132 = vsel %vm1131, %v1115, 0.0
      %1133 = vadd.xlane.f32.xlu0 %v1132
      %v1134 = vpop.xlane.xlu0 %1133
      %v1135 = vsel %vm1131, %v1116, 0.0
      %1136 = vadd.xlane.f32.xlu0 %v1135
      %v1137 = vpop.xlane.xlu0 %1136
      %v1138 = vsel %vm1131, %v1117, 0.0
      %1139 = vadd.xlane.f32.xlu0 %v1138
      %v1140 = vpop.xlane.xlu0 %1139
      %v1141 = vsel %vm1131, %v1118, 0.0
      %1142 = vadd.xlane.f32.xlu0 %v1141
      %v1143 = vpop.xlane.xlu0 %1142
      %v1144 = vsel %vm1131, %v1119, 0.0
      %1145 = vadd.xlane.f32.xlu0 %v1144
      %v1146 = vpop.xlane.xlu0 %1145
      %v1147 = vsel %vm1131, %v1120, 0.0
      %1148 = vadd.xlane.f32.xlu0 %v1147
      %v1149 = vpop.xlane.xlu0 %1148
      %v1150 = vsel %vm1131, %v1121, 0.0
      %1151 = vadd.xlane.f32.xlu0 %v1150
      %v1152 = vpop.xlane.xlu0 %1151
      %v1153 = vsel %vm1131, %v1122, 0.0
      %1154 = vadd.xlane.f32.xlu0 %v1153
      %v1155 = vpop.xlane.xlu0 %1154
      %v1156 = vsel %vm1131, %v1123, 0.0
      %1157 = vadd.xlane.f32.xlu0 %v1156
      %v1158 = vpop.xlane.xlu0 %1157
      %v1159 = vsel %vm1131, %v1124, 0.0
      %1160 = vadd.xlane.f32.xlu0 %v1159
      %v1161 = vpop.xlane.xlu0 %1160
      %v1162 = vsel %vm1131, %v1125, 0.0
      %1163 = vadd.xlane.f32.xlu0 %v1162
      %v1164 = vpop.xlane.xlu0 %1163
      %v1165 = vsel %vm1131, %v1126, 0.0
      %1166 = vadd.xlane.f32.xlu0 %v1165
      %v1167 = vpop.xlane.xlu0 %1166
      %v1168 = vsel %vm1131, %v1127, 0.0
      %1169 = vadd.xlane.f32.xlu0 %v1168
      %v1170 = vpop.xlane.xlu0 %1169
      %v1171 = vsel %vm1131, %v1128, 0.0
      %1172 = vadd.xlane.f32.xlu0 %v1171
      %v1173 = vpop.xlane.xlu0 %1172
      %v1174 = vsel %vm1131, %v1129, 0.0
      %1175 = vadd.xlane.f32.xlu0 %v1174
      %v1176 = vpop.xlane.xlu0 %1175
      %v1177 = vsel %vm1131, %v1130, 0.0
      %1178 = vadd.xlane.f32.xlu0 %v1177
      %v1179 = vpop.xlane.xlu0 %1178
      %vm1180 = vcmp.eq.s32.totalorder %v1113, 8
      %v1181 = vsel %vm1180, %v1134, %v1024
      %v1182 = vsel %vm1180, %v1137, %v1025
      %v1183 = vsel %vm1180, %v1140, %v1026
      %v1184 = vsel %vm1180, %v1143, %v1027
      %v1185 = vsel %vm1180, %v1146, %v1028
      %v1186 = vsel %vm1180, %v1149, %v1029
      %v1187 = vsel %vm1180, %v1152, %v1030
      %v1188 = vsel %vm1180, %v1155, %v1031
      %v1189 = vsel %vm1180, %v1158, %v1032
      %v1190 = vsel %vm1180, %v1161, %v1033
      %v1191 = vsel %vm1180, %v1164, %v1034
      %v1192 = vsel %vm1180, %v1167, %v1035
      %v1193 = vsel %vm1180, %v1170, %v1036
      %v1194 = vsel %vm1180, %v1173, %v1037
      %v1195 = vsel %vm1180, %v1176, %v1038
      %v1196 = vsel %vm1180, %v1179, %v1039
      %1197 = vst.msk [vmem:[%s275] sm:$0xff] %vm1131, %v1181
      %1198 = vst.msk [vmem:[%s275 + $0x8] sm:$0xff] %vm1131, %v1182
      %1199 = vst.msk [vmem:[%s275 + $0x10] sm:$0xff] %vm1131, %v1183
      %1200 = vst.msk [vmem:[%s275 + $0x18] sm:$0xff] %vm1131, %v1184
      %1201 = vst.msk [vmem:[%s275 + $0x20] sm:$0xff] %vm1131, %v1185
      %1202 = vst.msk [vmem:[%s275 + $0x28] sm:$0xff] %vm1131, %v1186
      %1203 = vst.msk [vmem:[%s275 + $0x30] sm:$0xff] %vm1131, %v1187
      %1204 = vst.msk [vmem:[%s275 + $0x38] sm:$0xff] %vm1131, %v1188
      %1205 = vst.msk [vmem:[%s275 + $0x40] sm:$0xff] %vm1131, %v1189
      %1206 = vst.msk [vmem:[%s275 + $0x48] sm:$0xff] %vm1131, %v1190
      %1207 = vst.msk [vmem:[%s275 + $0x50] sm:$0xff] %vm1131, %v1191
      %1208 = vst.msk [vmem:[%s275 + $0x58] sm:$0xff] %vm1131, %v1192
      %1209 = vst.msk [vmem:[%s275 + $0x60] sm:$0xff] %vm1131, %v1193
      %1210 = vst.msk [vmem:[%s275 + $0x68] sm:$0xff] %vm1131, %v1194
      %1211 = vst.msk [vmem:[%s275 + $0x70] sm:$0xff] %vm1131, %v1195
      %1212 = vst.msk [vmem:[%s275 + $0x78] sm:$0xff] %vm1131, %v1196
      %s1213 = smul.u32 16, %s17
      %p1214 = scmp.lt.s32.totalorder %s1213, 31
      %s1215 = scalar_select %p1214, %s1213, 31
      %s1216 = smul.addr %s1215, 8
      %s1217 = scalar_lea.vmem %s6, %s1216
      // Predicated region
      $region45: #{actor_ppo_gaussian_forward.1} parent=43 // pred_check
        %p1218 = pneg %p171
      $region46: #{actor_ppo_gaussian_forward.1} parent=43 // pred_check_branch
        %1220 = sbr.rel (%p1218) target = $region48
      $region47: #{actor_ppo_gaussian_forward.1} parent=43 // pred_region
        %s1221 = smul.u32 16, %s17
      $region48: #{actor_ppo_gaussian_forward.1} parent=43 // pred_fallthru
        _
    $region44: #{actor_ppo_gaussian_forward.1} parent=5 // pred_fallthru
      _
    %p1222 = scmp.le.s32.totalorder 2, %s12
    // Predicated region
    $region49: #{actor_ppo_gaussian_forward.1} parent=5 // pred_check
      %p1223 = pneg %p1222
    $region50: #{actor_ppo_gaussian_forward.1} parent=5 // pred_check_branch
      %1225 = sbr.rel (%p1223) target = $region52
    $region51: #{actor_ppo_gaussian_forward.1} parent=5 // pred_region
      %s1226 = ssub.s32 %s12, 2
      // Predicated region
      $region53: #{actor_ppo_gaussian_forward.1} parent=51 // pred_check
        %p1227 = pneg %p177
      $region54: #{actor_ppo_gaussian_forward.1} parent=51 // pred_check_branch
        %1229 = sbr.rel (%p1227) target = $region56
      $region55: #{actor_ppo_gaussian_forward.1} parent=51 // pred_region
        %s1230 = smul.u32 16, %s18
        %p1231 = scmp.lt.s32.totalorder %s1230, 31
        %s1232 = scalar_select %p1231, %s1230, 31
        %s1233 = smul.addr %s1232, 8
        %s1234 = scalar_lea.vmem %s6, %s1233
      $region56: #{actor_ppo_gaussian_forward.1} parent=51 // pred_fallthru
        _
    $region52: #{actor_ppo_gaussian_forward.1} parent=5 // pred_fallthru
      _
  $region6: #{actor_ppo_gaussian_forward.1} parent=0 // loop_footer
    %s16 = sadd.s32 1, %s12
  $region7: #{actor_ppo_gaussian_forward.1} parent=0 // loop_footer_branch
    %11 = sbr.rel target = $region3
  $region8: #{actor_ppo_gaussian_forward.1} parent=0 // loop_exit
    _

</llo_original>
